<compile_context>
chip_gen: v5e
topology: v5e:2x2
jax: 0.10.0
libtpu: 0.0.40
codegen_flags: <defaults>
</compile_context>

<pallas_src>
import jax
import jax.numpy as jnp
from jax.experimental import pallas as pl
from jax.experimental.pallas import tpu as pltpu


def _round_up(n, m):
    return ((n + m - 1) // m) * m


def _task_kernel(task_ref, x_ref, w1_ref, b1_ref, w2_ref, b2_ref, o_ref):
    # task_ref (SMEM) is consumed by the BlockSpec index_maps; unused here.
    # shared trunk: [TM, F] @ [F, Hp] -> f32 [TM, Hp], +bias, ReLU
    h = jnp.dot(x_ref[...], w1_ref[...], preferred_element_type=jnp.float32)
    h = jnp.maximum(h + b1_ref[...], 0.0)
    # selected task head: [TM, Hp] @ [Hp, Op] -> f32 [TM, Op], +bias
    o_ref[...] = (
        jnp.dot(h.astype(w2_ref.dtype), w2_ref[...],
                preferred_element_type=jnp.float32)
        + b2_ref[...]
    )


def task_specific_forward(x_nchw, params, task_name):
    """Runs the synthetic multi-task model and returns outputs[task_name]."""
    task_names = tuple(params["heads"].keys())
    task_idx = task_names.index(task_name)

    B = x_nchw.shape[0]
    x_flat = x_nchw.reshape(B, -1)                      # glue: flatten NCHW
    F = x_flat.shape[1]
    H = params["w1"].shape[1]
    O = params["heads"][task_names[0]]["w"].shape[1]

    # Lane/sublane friendly padded sizes (zeros are inert through relu+matmul).
    LANE = 128
    TM = min(128, _round_up(B, 16))                     # batch tile (bf16 sublanes)
    B_pad = _round_up(B, TM)
    F_pad = _round_up(F, LANE)
    H_pad = _round_up(H, LANE)
    O_pad = _round_up(O, LANE)

    # bf16 activations/weights for the MXU; biases / accumulation stay f32.
    x_p = jnp.zeros((B_pad, F_pad), jnp.bfloat16).at[:B, :F].set(
        x_flat.astype(jnp.bfloat16))
    w1_p = jnp.zeros((F_pad, H_pad), jnp.bfloat16).at[:F, :H].set(
        params["w1"].astype(jnp.bfloat16))
    b1_p = jnp.zeros((1, H_pad), jnp.float32).at[:, :H].set(
        params["b1"].astype(jnp.float32))

    # Stack all task heads; the runtime task index (scalar prefetch) selects
    # which head slice gets DMA'd -- no per-task recompilation.
    T = len(task_names)
    w2_p = jnp.zeros((T, H_pad, O_pad), jnp.bfloat16)
    b2_p = jnp.zeros((T, 1, O_pad), jnp.float32)
    for t, name in enumerate(task_names):
        w2_p = w2_p.at[t, :H, :O].set(
            params["heads"][name]["w"].astype(jnp.bfloat16))
        b2_p = b2_p.at[t, :, :O].set(
            params["heads"][name]["b"].astype(jnp.float32))

    task_arr = jnp.array([task_idx], dtype=jnp.int32)
    grid_m = B_pad // TM

    out = pl.pallas_call(
        _task_kernel,
        out_shape=jax.ShapeDtypeStruct((B_pad, O_pad), jnp.float32),
        grid_spec=pltpu.PrefetchScalarGridSpec(
            num_scalar_prefetch=1,
            grid=(grid_m,),
            in_specs=[
                pl.BlockSpec((TM, F_pad), lambda m, t: (m, 0)),          # x
                pl.BlockSpec((F_pad, H_pad), lambda m, t: (0, 0)),       # W1
                pl.BlockSpec((1, H_pad), lambda m, t: (0, 0)),           # b1
                pl.BlockSpec((None, H_pad, O_pad),
                             lambda m, t: (t[0], 0, 0)),                 # W2[task]
                pl.BlockSpec((None, 1, O_pad),
                             lambda m, t: (t[0], 0, 0)),                 # b2[task]
            ],
            out_specs=pl.BlockSpec((TM, O_pad), lambda m, t: (m, 0)),
        ),
        compiler_params=pltpu.CompilerParams(
            dimension_semantics=("parallel",),   # batch tiles -> 2 TCs on v7x
        ),
    )(task_arr, x_p, w1_p, b1_p, w2_p, b2_p)

    return out[:B, :O]                                   # strip padding


def make_params(key, in_features, hidden, out_features, task_names):
    k1, k2, *hk = jax.random.split(key, 2 + 2 * len(task_names))
    params = {
        "w1": (jax.random.normal(k1, (in_features, hidden), jnp.float32)
               / jnp.sqrt(in_features)),
        "b1": jax.random.normal(k2, (1, hidden), jnp.float32) * 0.01,
        "heads": {},
    }
    for i, t in enumerate(task_names):
        kw, kb = hk[2 * i], hk[2 * i + 1]
        params["heads"][t] = {
            "w": (jax.random.normal(kw, (hidden, out_features), jnp.float32)
                  / jnp.sqrt(hidden)),
            "b": jax.random.normal(kb, (1, out_features), jnp.float32) * 0.01,
        }
    return params


if __name__ == "__main__":
    key = jax.random.PRNGKey(0)
    kx, kp = jax.random.split(key)

    B, C, Hs, Ws = 2, 4, 16, 16            # x: NCHW
    hidden, out_features = 32, 8
    task_names = ("task_a", "task_b")

    x = jax.random.normal(kx, (B, C, Hs, Ws), jnp.float32)
    params = make_params(kp, C * Hs * Ws, hidden, out_features, task_names)

    # Pure-JAX f32 reference of the same multi-task model + task selection.
    x_flat = x.reshape(B, -1)
    h_ref = jnp.maximum(x_flat @ params["w1"] + params["b1"], 0.0)
    outputs_ref = {
        t: h_ref @ params["heads"][t]["w"] + params["heads"][t]["b"]
        for t in task_names
    }

    ok = True
    for task_name in task_names:           # runtime task selection, same kernel
        y = task_specific_forward(x, params, task_name)
        y = jax.block_until_ready(y)
        y_ref = outputs_ref[task_name]
        assert y.shape == (B, out_features)
        # bf16 inputs with f32 accumulation -> loosened tolerance (per review).
        ok &= bool(jnp.allclose(y, y_ref, atol=5e-2, rtol=5e-2))

    assert ok
    print("KERNEL_OK")
</pallas_src>

<mosaic_0001>
module attributes {stable_mosaic.version = 11 : i64} {
  func.func @_task_kernel(%arg0: i32, %arg1: memref<1xi32, #tpu.memory_space<smem>>, %arg2: memref<16x1024xbf16, #tpu.memory_space<vmem>>, %arg3: memref<1024x128xbf16, #tpu.memory_space<vmem>>, %arg4: memref<1x128xf32, #tpu.memory_space<vmem>>, %arg5: memref<1x128x128xbf16, #tpu.memory_space<vmem>>, %arg6: memref<1x1x128xf32, #tpu.memory_space<vmem>>, %arg7: memref<16x128xf32, #tpu.memory_space<vmem>>) attributes {dimension_semantics = [#tpu.dimension_semantics<parallel>], iteration_bounds = array<i64: 1>, scalar_prefetch = 1 : i64, scratch_operands = 0 : i64, tpu.core_type = #tpu.core_type<tc>, window_params = [{transform_indices = @transform_0, window_bounds = array<i64: 16, 1024>}, {pipeline_mode = #tpu.pipeline_mode<synchronous>, transform_indices = @transform_1, window_bounds = array<i64: 1024, 128>}, {pipeline_mode = #tpu.pipeline_mode<synchronous>, transform_indices = @transform_2, window_bounds = array<i64: 1, 128>}, {transform_indices = @transform_3, window_bounds = array<i64: 1, 128, 128>}, {transform_indices = @transform_4, window_bounds = array<i64: 1, 1, 128>}, {transform_indices = @transform_5, window_bounds = array<i64: 16, 128>}]} {
    %c0 = arith.constant 0 : index
    %c0_0 = arith.constant 0 : index
    %0 = vector.load %arg2[%c0, %c0_0] : memref<16x1024xbf16, #tpu.memory_space<vmem>>, vector<16x1024xbf16>
    %c0_1 = arith.constant 0 : index
    %c0_2 = arith.constant 0 : index
    %1 = vector.load %arg3[%c0_1, %c0_2] : memref<1024x128xbf16, #tpu.memory_space<vmem>>, vector<1024x128xbf16>
    %cst = arith.constant dense<0.000000e+00> : vector<16x128xf32>
    %2 = tpu.matmul %0, %1, %cst {dimension_numbers = #tpu.dot_dimension_numbers<[1], [0], [0], [1], [0, 0, 1, 1], [], []>} : vector<16x1024xbf16>, vector<1024x128xbf16>, vector<16x128xf32> -> vector<16x128xf32>
    %c0_3 = arith.constant 0 : index
    %c0_4 = arith.constant 0 : index
    %3 = vector.load %arg4[%c0_3, %c0_4] : memref<1x128xf32, #tpu.memory_space<vmem>>, vector<1x128xf32>
    %4 = vector.broadcast %3 : vector<1x128xf32> to vector<16x128xf32>
    %5 = arith.addf %2, %4 : vector<16x128xf32>
    %cst_5 = arith.constant 0.000000e+00 : f32
    %6 = vector.broadcast %cst_5 : f32 to vector<16x128xf32>
    %7 = arith.maximumf %5, %6 : vector<16x128xf32>
    %8 = arith.truncf %7 : vector<16x128xf32> to vector<16x128xbf16>
    %c0_6 = arith.constant 0 : index
    %c0_7 = arith.constant 0 : index
    %c0_8 = arith.constant 0 : index
    %9 = vector.load %arg5[%c0_6, %c0_7, %c0_8] : memref<1x128x128xbf16, #tpu.memory_space<vmem>>, vector<1x128x128xbf16>
    %10 = vector.shape_cast %9 : vector<1x128x128xbf16> to vector<128x128xbf16>
    %cst_9 = arith.constant dense<0.000000e+00> : vector<16x128xf32>
    %11 = tpu.matmul %8, %10, %cst_9 {dimension_numbers = #tpu.dot_dimension_numbers<[1], [0], [0], [1], [0, 0, 1, 1], [], []>} : vector<16x128xbf16>, vector<128x128xbf16>, vector<16x128xf32> -> vector<16x128xf32>
    %c0_10 = arith.constant 0 : index
    %c0_11 = arith.constant 0 : index
    %c0_12 = arith.constant 0 : index
    %12 = vector.load %arg6[%c0_10, %c0_11, %c0_12] : memref<1x1x128xf32, #tpu.memory_space<vmem>>, vector<1x1x128xf32>
    %13 = vector.shape_cast %12 : vector<1x1x128xf32> to vector<1x128xf32>
    %14 = vector.broadcast %13 : vector<1x128xf32> to vector<16x128xf32>
    %15 = arith.addf %11, %14 : vector<16x128xf32>
    %c0_13 = arith.constant 0 : index
    %c0_14 = arith.constant 0 : index
    %16 = vector.load %arg7[%c0_13, %c0_14] : memref<16x128xf32, #tpu.memory_space<vmem>>, vector<16x128xf32>
    tpu.vector_store %arg7[%c0_13, %c0_14], %15 {strides = array<i32>} : memref<16x128xf32, #tpu.memory_space<vmem>>, vector<16x128xf32>,
    return
  }
  func.func @transform_0(%arg0: i32, %arg1: memref<1xi32, #tpu.memory_space<smem>>) -> (i32, i32) {
    %c0_i32 = arith.constant 0 : i32
    %c0_i32_0 = arith.constant 0 : i32
    return %arg0, %c0_i32 : i32, i32
  }
  func.func @transform_1(%arg0: i32, %arg1: memref<1xi32, #tpu.memory_space<smem>>) -> (i32, i32) {
    %c0_i32 = arith.constant 0 : i32
    %c0_i32_0 = arith.constant 0 : i32
    %c0_i32_1 = arith.constant 0 : i32
    return %c0_i32, %c0_i32_0 : i32, i32
  }
  func.func @transform_2(%arg0: i32, %arg1: memref<1xi32, #tpu.memory_space<smem>>) -> (i32, i32) {
    %c0_i32 = arith.constant 0 : i32
    %c0_i32_0 = arith.constant 0 : i32
    %c0_i32_1 = arith.constant 0 : i32
    return %c0_i32, %c0_i32_0 : i32, i32
  }
  func.func @transform_3(%arg0: i32, %arg1: memref<1xi32, #tpu.memory_space<smem>>) -> (i32, i32, i32) {
    %c0 = arith.constant 0 : index
    %0 = memref.load %arg1[%c0] : memref<1xi32, #tpu.memory_space<smem>>
    %c0_i32 = arith.constant 0 : i32
    %c0_i32_0 = arith.constant 0 : i32
    %c0_i32_1 = arith.constant 0 : i32
    return %0, %c0_i32, %c0_i32_0 : i32, i32, i32
  }
  func.func @transform_4(%arg0: i32, %arg1: memref<1xi32, #tpu.memory_space<smem>>) -> (i32, i32, i32) {
    %c0 = arith.constant 0 : index
    %0 = memref.load %arg1[%c0] : memref<1xi32, #tpu.memory_space<smem>>
    %c0_i32 = arith.constant 0 : i32
    %c0_i32_0 = arith.constant 0 : i32
    %c0_i32_1 = arith.constant 0 : i32
    return %0, %c0_i32, %c0_i32_0 : i32, i32, i32
  }
  func.func @transform_5(%arg0: i32, %arg1: memref<1xi32, #tpu.memory_space<smem>>) -> (i32, i32) {
    %c0_i32 = arith.constant 0 : i32
    %c0_i32_0 = arith.constant 0 : i32
    return %arg0, %c0_i32 : i32, i32
  }
}

</mosaic_0001>

<llo_original>
// kernel: tpu_custom_call.1
$region0: #{tpu_custom_call.1}
  #allocation0 [shape = 'u32[]', space=smem, size = 0x4, offset = 0x4, fixed_abs, tag = 'smem constant byte address 0x4 - core index']
  #allocation1 [shape = 'u32[72,128]{1,0:T(1,128)}', space=vmem, size = 0x9000, scoped, tag = 'internal scratch']
  #allocation2 [shape = 's32[1]{0}', space=sflag, size = 0x4, scoped, tag = 'scoped memory for tpu_custom_call.1']
  #allocation3 [shape = 's32[1]{0:T(128)S(6)}', space=smem, size = 0x200, scoped, tag = 'prefetched SMEM operand 0']
  %s0 = inlined_call_operand.<no memory space> [shape: s32[1], index: 0, kind: input, shape index: {}]
  %s1 = inlined_call_operand.hbm [shape: bf16[16,1024], index: 1, kind: input, shape index: {}]
  %s2 = inlined_call_operand.hbm [shape: bf16[1024,128], index: 2, kind: input, shape index: {}]
  %s3 = inlined_call_operand.vmem [shape: f32[1,128], index: 3, kind: input, shape index: {}]
  %s4 = inlined_call_operand.hbm [shape: bf16[2,128,128], index: 4, kind: input, shape index: {}]
  %s5 = inlined_call_operand.vmem [shape: f32[2,1,128], index: 5, kind: input, shape index: {}]
  %s6 = inlined_call_operand.hbm [shape: f32[16,128], index: 6, kind: output, shape index: {}]
  %s7 = sld [smem:[#allocation0]]
  $region42: #{tpu_custom_call.1} parent=0
    _
  %s9 = ssub.s32 1, %s7
  %s10 = scalar_select 0, %s9, %s7
  %11 = sst [smem:[#allocation3]] %s0
  $region1: #{tpu_custom_call.1} parent=0
    #allocation4 [shape = 'u8[32768]{0}', space=vmem, size = 0x8000, scoped, tag = 'input window, operand 1, single buffered']
    #allocation5 [shape = 's32[1]{0}', space=sflag, size = 0x4, scoped, tag = 'scoped memory for tpu_custom_call.1']
    #allocation6 [shape = 's32[1]{0}', space=sflag, size = 0x4, scoped, tag = 'scoped memory for tpu_custom_call.1']
    #allocation7 [shape = 'u8[262144]{0}', space=vmem, size = 0x40000, scoped, tag = 'input window, operand 2, single buffered']
    #allocation8 [shape = 's32[1]{0}', space=sflag, size = 0x4, scoped, tag = 'scoped memory for tpu_custom_call.1']
    #allocation9 [shape = 'u8[32768]{0}', space=vmem, size = 0x8000, scoped, tag = 'input window, operand 4, single buffered']
    #allocation10 [shape = 'u8[8192]{0}', space=vmem, size = 0x2000, scoped, tag = 'output window, operand 0, single buffered']
    %12 = vsyncpa [#allocation5], 0
    %13 = vsyncpa [#allocation8], 0
    %14 = vsyncpa [#allocation6], 0
    // Predicated region
    $region2: #{tpu_custom_call.1} parent=1 // pred_check
      _
    $region3: #{tpu_custom_call.1} parent=1 // pred_check_branch
      %16 = sbr.rel (0) target = $region5
    $region4: #{tpu_custom_call.1} parent=1 // pred_region
      %18 = vsyncadd [#allocation5], 0
      %s19 = sshll.u32 %s1, 4
      %s20 = int_to_ptr.hbm [resolvable:$true] %s19
      %s21 = sshll.u32 [#allocation4], 4
      %s22 = int_to_ptr.vmem [resolvable:$true] %s21
      %27 = dma.hbm_to_vmem [thread:$0]  %s20, 1024, %s22, [#allocation5], 512, 512, 32
    $region5: #{tpu_custom_call.1} parent=1 // pred_fallthru
      _
    // Predicated region
    $region6: #{tpu_custom_call.1} parent=1 // pred_check
      _
    $region7: #{tpu_custom_call.1} parent=1 // pred_check_branch
      %29 = sbr.rel (0) target = $region9
    $region8: #{tpu_custom_call.1} parent=1 // pred_region
      %31 = vsyncadd [#allocation8], 0
      %s32 = sshll.u32 %s2, 4
      %s33 = int_to_ptr.hbm [resolvable:$true] %s32
      %s34 = sshll.u32 [#allocation7], 4
      %s35 = int_to_ptr.vmem [resolvable:$true] %s34
      %40 = dma.hbm_to_vmem [thread:$0]  %s33, 8192, %s35, [#allocation8], 64, 64, 4
    $region9: #{tpu_custom_call.1} parent=1 // pred_fallthru
      _
    // Predicated region
    $region10: #{tpu_custom_call.1} parent=1 // pred_check
      _
    $region11: #{tpu_custom_call.1} parent=1 // pred_check_branch
      %42 = sbr.rel (0) target = $region13
    $region12: #{tpu_custom_call.1} parent=1 // pred_region
      _
    $region13: #{tpu_custom_call.1} parent=1 // pred_fallthru
      _
    // Predicated region
    $region14: #{tpu_custom_call.1} parent=1 // pred_check
      _
    $region15: #{tpu_custom_call.1} parent=1 // pred_check_branch
      %44 = sbr.rel (0) target = $region17
    $region16: #{tpu_custom_call.1} parent=1 // pred_region
      %s45 = sld [smem:[#allocation3]]
      %47 = vsyncadd [#allocation8], 0
      %s48 = smul.addr %s45, 16
      %s49 = smul.addr %s48, 4
      %s50 = scalar_lea.hbm %s4, %s49
      %s51 = sshll.u32 %s50, 4
      %s52 = int_to_ptr.hbm [resolvable:$true] %s51
      %s53 = sshll.u32 [#allocation9], 4
      %s54 = int_to_ptr.vmem [resolvable:$true] %s53
      %59 = dma.hbm_to_vmem [thread:$0]  %s52, 1024, %s54, [#allocation8], 64, 64, 4
    $region17: #{tpu_custom_call.1} parent=1 // pred_fallthru
      _
    // Predicated region
    $region18: #{tpu_custom_call.1} parent=1 // pred_check
      _
    $region19: #{tpu_custom_call.1} parent=1 // pred_check_branch
      %61 = sbr.rel (0) target = $region21
    $region20: #{tpu_custom_call.1} parent=1 // pred_region
      %s62 = sld [smem:[#allocation3]]
      %p63 = scmp.lt.s32.totalorder %s62, 1
      %s64 = scalar_select %p63, %s62, 1
      %s65 = scalar_lea.vmem %s5, %s64
      %s66 = sld [smem:[#allocation3]]
    $region21: #{tpu_custom_call.1} parent=1 // pred_fallthru
      _
    // Predicated region
    $region22: #{tpu_custom_call.1} parent=1 // pred_check
      _
    $region23: #{tpu_custom_call.1} parent=1 // pred_check_branch
      %68 = sbr.rel (0) target = $region25
    $region24: #{tpu_custom_call.1} parent=1 // pred_region
      %70 = dma.done [#allocation5], 1024
    $region25: #{tpu_custom_call.1} parent=1 // pred_fallthru
      _
    // Predicated region
    $region26: #{tpu_custom_call.1} parent=1 // pred_check
      _
    $region27: #{tpu_custom_call.1} parent=1 // pred_check_branch
      %72 = sbr.rel (0) target = $region29
    $region28: #{tpu_custom_call.1} parent=1 // pred_region
      %74 = dma.done [#allocation8], 8192
    $region29: #{tpu_custom_call.1} parent=1 // pred_fallthru
      _
    // Predicated region
    $region30: #{tpu_custom_call.1} parent=1 // pred_check
      _
    $region31: #{tpu_custom_call.1} parent=1 // pred_check_branch
      %76 = sbr.rel (0) target = $region33
    $region32: #{tpu_custom_call.1} parent=1 // pred_region
      %78 = dma.done [#allocation8], 1024
    $region33: #{tpu_custom_call.1} parent=1 // pred_fallthru
      _
    %s79 = sld [smem:[#allocation3]]
    %p80 = scmp.lt.s32.totalorder %s79, 1
    %s81 = scalar_select %p80, %s79, 1
    %s82 = scalar_lea.vmem %s5, %s81
    %s83 = sld [smem:[#allocation3]]
    %s84 = sld [smem:[#allocation3]]
    %p85 = scmp.lt.s32.totalorder %s84, 1
    %s86 = scalar_select %p85, %s84, 1
    %s87 = scalar_lea.vmem %s5, %s86
    %s88 = sld [smem:[#allocation3]]
    %v89 = vld [vmem:[#allocation4] sm:$0xff]
    %v90 = vld [vmem:[#allocation4 + $0x8] sm:$0xff]
    %v91 = vld [vmem:[#allocation4 + $0x10] sm:$0xff]
    %v92 = vld [vmem:[#allocation4 + $0x18] sm:$0xff]
    %v93 = vld [vmem:[#allocation4 + $0x20] sm:$0xff]
    %v94 = vld [vmem:[#allocation4 + $0x28] sm:$0xff]
    %v95 = vld [vmem:[#allocation4 + $0x30] sm:$0xff]
    %v96 = vld [vmem:[#allocation4 + $0x38] sm:$0xff]
    %v97 = vld [vmem:[#allocation7] sm:$0xf]
    %v98 = vld [vmem:[#allocation7 + $0x4] sm:$0xf]
    %v99 = vld [vmem:[#allocation7 + $0x8] sm:$0xf]
    %v100 = vld [vmem:[#allocation7 + $0xc] sm:$0xf]
    %v101 = vld [vmem:[#allocation7 + $0x10] sm:$0xf]
    %v102 = vld [vmem:[#allocation7 + $0x14] sm:$0xf]
    %v103 = vld [vmem:[#allocation7 + $0x18] sm:$0xf]
    %v104 = vld [vmem:[#allocation7 + $0x1c] sm:$0xf]
    %v105 = vld [vmem:[#allocation7 + $0x20] sm:$0xf]
    %v106 = vld [vmem:[#allocation7 + $0x24] sm:$0xf]
    %v107 = vld [vmem:[#allocation7 + $0x28] sm:$0xf]
    %v108 = vld [vmem:[#allocation7 + $0x2c] sm:$0xf]
    %v109 = vld [vmem:[#allocation7 + $0x30] sm:$0xf]
    %v110 = vld [vmem:[#allocation7 + $0x34] sm:$0xf]
    %v111 = vld [vmem:[#allocation7 + $0x38] sm:$0xf]
    %v112 = vld [vmem:[#allocation7 + $0x3c] sm:$0xf]
    %v113 = vld [vmem:[#allocation7 + $0x40] sm:$0xf]
    %v114 = vld [vmem:[#allocation7 + $0x44] sm:$0xf]
    %v115 = vld [vmem:[#allocation7 + $0x48] sm:$0xf]
    %v116 = vld [vmem:[#allocation7 + $0x4c] sm:$0xf]
    %v117 = vld [vmem:[#allocation7 + $0x50] sm:$0xf]
    %v118 = vld [vmem:[#allocation7 + $0x54] sm:$0xf]
    %v119 = vld [vmem:[#allocation7 + $0x58] sm:$0xf]
    %v120 = vld [vmem:[#allocation7 + $0x5c] sm:$0xf]
    %v121 = vld [vmem:[#allocation7 + $0x60] sm:$0xf]
    %v122 = vld [vmem:[#allocation7 + $0x64] sm:$0xf]
    %v123 = vld [vmem:[#allocation7 + $0x68] sm:$0xf]
    %v124 = vld [vmem:[#allocation7 + $0x6c] sm:$0xf]
    %v125 = vld [vmem:[#allocation7 + $0x70] sm:$0xf]
    %v126 = vld [vmem:[#allocation7 + $0x74] sm:$0xf]
    %v127 = vld [vmem:[#allocation7 + $0x78] sm:$0xf]
    %v128 = vld [vmem:[#allocation7 + $0x7c] sm:$0xf]
    %v129 = vld [vmem:[#allocation7 + $0x80] sm:$0xf]
    %v130 = vld [vmem:[#allocation7 + $0x84] sm:$0xf]
    %v131 = vld [vmem:[#allocation7 + $0x88] sm:$0xf]
    %v132 = vld [vmem:[#allocation7 + $0x8c] sm:$0xf]
    %v133 = vld [vmem:[#allocation7 + $0x90] sm:$0xf]
    %v134 = vld [vmem:[#allocation7 + $0x94] sm:$0xf]
    %v135 = vld [vmem:[#allocation7 + $0x98] sm:$0xf]
    %v136 = vld [vmem:[#allocation7 + $0x9c] sm:$0xf]
    %v137 = vld [vmem:[#allocation7 + $0xa0] sm:$0xf]
    %v138 = vld [vmem:[#allocation7 + $0xa4] sm:$0xf]
    %v139 = vld [vmem:[#allocation7 + $0xa8] sm:$0xf]
    %v140 = vld [vmem:[#allocation7 + $0xac] sm:$0xf]
    %v141 = vld [vmem:[#allocation7 + $0xb0] sm:$0xf]
    %v142 = vld [vmem:[#allocation7 + $0xb4] sm:$0xf]
    %v143 = vld [vmem:[#allocation7 + $0xb8] sm:$0xf]
    %v144 = vld [vmem:[#allocation7 + $0xbc] sm:$0xf]
    %v145 = vld [vmem:[#allocation7 + $0xc0] sm:$0xf]
    %v146 = vld [vmem:[#allocation7 + $0xc4] sm:$0xf]
    %v147 = vld [vmem:[#allocation7 + $0xc8] sm:$0xf]
    %v148 = vld [vmem:[#allocation7 + $0xcc] sm:$0xf]
    %v149 = vld [vmem:[#allocation7 + $0xd0] sm:$0xf]
    %v150 = vld [vmem:[#allocation7 + $0xd4] sm:$0xf]
    %v151 = vld [vmem:[#allocation7 + $0xd8] sm:$0xf]
    %v152 = vld [vmem:[#allocation7 + $0xdc] sm:$0xf]
    %v153 = vld [vmem:[#allocation7 + $0xe0] sm:$0xf]
    %v154 = vld [vmem:[#allocation7 + $0xe4] sm:$0xf]
    %v155 = vld [vmem:[#allocation7 + $0xe8] sm:$0xf]
    %v156 = vld [vmem:[#allocation7 + $0xec] sm:$0xf]
    %v157 = vld [vmem:[#allocation7 + $0xf0] sm:$0xf]
    %v158 = vld [vmem:[#allocation7 + $0xf4] sm:$0xf]
    %v159 = vld [vmem:[#allocation7 + $0xf8] sm:$0xf]
    %v160 = vld [vmem:[#allocation7 + $0xfc] sm:$0xf]
    %v161 = vld [vmem:[#allocation7 + $0x100] sm:$0xf]
    %v162 = vld [vmem:[#allocation7 + $0x104] sm:$0xf]
    %v163 = vld [vmem:[#allocation7 + $0x108] sm:$0xf]
    %v164 = vld [vmem:[#allocation7 + $0x10c] sm:$0xf]
    %v165 = vld [vmem:[#allocation7 + $0x110] sm:$0xf]
    %v166 = vld [vmem:[#allocation7 + $0x114] sm:$0xf]
    %v167 = vld [vmem:[#allocation7 + $0x118] sm:$0xf]
    %v168 = vld [vmem:[#allocation7 + $0x11c] sm:$0xf]
    %v169 = vld [vmem:[#allocation7 + $0x120] sm:$0xf]
    %v170 = vld [vmem:[#allocation7 + $0x124] sm:$0xf]
    %v171 = vld [vmem:[#allocation7 + $0x128] sm:$0xf]
    %v172 = vld [vmem:[#allocation7 + $0x12c] sm:$0xf]
    %v173 = vld [vmem:[#allocation7 + $0x130] sm:$0xf]
    %v174 = vld [vmem:[#allocation7 + $0x134] sm:$0xf]
    %v175 = vld [vmem:[#allocation7 + $0x138] sm:$0xf]
    %v176 = vld [vmem:[#allocation7 + $0x13c] sm:$0xf]
    %v177 = vld [vmem:[#allocation7 + $0x140] sm:$0xf]
    %v178 = vld [vmem:[#allocation7 + $0x144] sm:$0xf]
    %v179 = vld [vmem:[#allocation7 + $0x148] sm:$0xf]
    %v180 = vld [vmem:[#allocation7 + $0x14c] sm:$0xf]
    %v181 = vld [vmem:[#allocation7 + $0x150] sm:$0xf]
    %v182 = vld [vmem:[#allocation7 + $0x154] sm:$0xf]
    %v183 = vld [vmem:[#allocation7 + $0x158] sm:$0xf]
    %v184 = vld [vmem:[#allocation7 + $0x15c] sm:$0xf]
    %v185 = vld [vmem:[#allocation7 + $0x160] sm:$0xf]
    %v186 = vld [vmem:[#allocation7 + $0x164] sm:$0xf]
    %v187 = vld [vmem:[#allocation7 + $0x168] sm:$0xf]
    %v188 = vld [vmem:[#allocation7 + $0x16c] sm:$0xf]
    %v189 = vld [vmem:[#allocation7 + $0x170] sm:$0xf]
    %v190 = vld [vmem:[#allocation7 + $0x174] sm:$0xf]
    %v191 = vld [vmem:[#allocation7 + $0x178] sm:$0xf]
    %v192 = vld [vmem:[#allocation7 + $0x17c] sm:$0xf]
    %v193 = vld [vmem:[#allocation7 + $0x180] sm:$0xf]
    %v194 = vld [vmem:[#allocation7 + $0x184] sm:$0xf]
    %v195 = vld [vmem:[#allocation7 + $0x188] sm:$0xf]
    %v196 = vld [vmem:[#allocation7 + $0x18c] sm:$0xf]
    %v197 = vld [vmem:[#allocation7 + $0x190] sm:$0xf]
    %v198 = vld [vmem:[#allocation7 + $0x194] sm:$0xf]
    %v199 = vld [vmem:[#allocation7 + $0x198] sm:$0xf]
    %v200 = vld [vmem:[#allocation7 + $0x19c] sm:$0xf]
    %v201 = vld [vmem:[#allocation7 + $0x1a0] sm:$0xf]
    %v202 = vld [vmem:[#allocation7 + $0x1a4] sm:$0xf]
    %v203 = vld [vmem:[#allocation7 + $0x1a8] sm:$0xf]
    %v204 = vld [vmem:[#allocation7 + $0x1ac] sm:$0xf]
    %v205 = vld [vmem:[#allocation7 + $0x1b0] sm:$0xf]
    %v206 = vld [vmem:[#allocation7 + $0x1b4] sm:$0xf]
    %v207 = vld [vmem:[#allocation7 + $0x1b8] sm:$0xf]
    %v208 = vld [vmem:[#allocation7 + $0x1bc] sm:$0xf]
    %v209 = vld [vmem:[#allocation7 + $0x1c0] sm:$0xf]
    %v210 = vld [vmem:[#allocation7 + $0x1c4] sm:$0xf]
    %v211 = vld [vmem:[#allocation7 + $0x1c8] sm:$0xf]
    %v212 = vld [vmem:[#allocation7 + $0x1cc] sm:$0xf]
    %v213 = vld [vmem:[#allocation7 + $0x1d0] sm:$0xf]
    %v214 = vld [vmem:[#allocation7 + $0x1d4] sm:$0xf]
    %v215 = vld [vmem:[#allocation7 + $0x1d8] sm:$0xf]
    %v216 = vld [vmem:[#allocation7 + $0x1dc] sm:$0xf]
    %v217 = vld [vmem:[#allocation7 + $0x1e0] sm:$0xf]
    %v218 = vld [vmem:[#allocation7 + $0x1e4] sm:$0xf]
    %v219 = vld [vmem:[#allocation7 + $0x1e8] sm:$0xf]
    %v220 = vld [vmem:[#allocation7 + $0x1ec] sm:$0xf]
    %v221 = vld [vmem:[#allocation7 + $0x1f0] sm:$0xf]
    %v222 = vld [vmem:[#allocation7 + $0x1f4] sm:$0xf]
    %v223 = vld [vmem:[#allocation7 + $0x1f8] sm:$0xf]
    %v224 = vld [vmem:[#allocation7 + $0x1fc] sm:$0xf]
    %v225 = vld [vmem:[%s3] sm:$0x1]
    %v227 = vperm.slane %v225, 0
    %v237 = vunpack.c.l.b16 %v89
    %v238 = vunpack.c.h.b16 %v89
    %v239 = vunpack.c.l.b16 %v90
    %v240 = vunpack.c.h.b16 %v90
    %v241 = vunpack.c.l.b16 %v91
    %v242 = vunpack.c.h.b16 %v91
    %v243 = vunpack.c.l.b16 %v92
    %v244 = vunpack.c.h.b16 %v92
    %v245 = vunpack.c.l.b16 %v93
    %v246 = vunpack.c.h.b16 %v93
    %v247 = vunpack.c.l.b16 %v94
    %v248 = vunpack.c.h.b16 %v94
    %v249 = vunpack.c.l.b16 %v95
    %v250 = vunpack.c.h.b16 %v95
    %v251 = vunpack.c.l.b16 %v96
    %v252 = vunpack.c.h.b16 %v96
    %v253 = vpack.c.b16 %v245, %v237
    %v254 = vpack.c.b16 %v246, %v238
    %v255 = vpack.c.b16 %v247, %v239
    %v256 = vpack.c.b16 %v248, %v240
    %v257 = vpack.c.b16 %v249, %v241
    %v258 = vpack.c.b16 %v250, %v242
    %v259 = vpack.c.b16 %v251, %v243
    %v260 = vpack.c.b16 %v252, %v244
    %v397 = vunpack.c.l.b16 %v97
    %v398 = vunpack.c.l.b16 %v98
    %v399 = vunpack.c.l.b16 %v99
    %v400 = vunpack.c.l.b16 %v100
    %v401 = vunpack.c.l.b16 %v101
    %v402 = vunpack.c.l.b16 %v102
    %v403 = vunpack.c.l.b16 %v103
    %v404 = vunpack.c.l.b16 %v104
    %v405 = vunpack.c.l.b16 %v105
    %v406 = vunpack.c.l.b16 %v106
    %v407 = vunpack.c.l.b16 %v107
    %v408 = vunpack.c.l.b16 %v108
    %v409 = vunpack.c.l.b16 %v109
    %v410 = vunpack.c.l.b16 %v110
    %v411 = vunpack.c.l.b16 %v111
    %v412 = vunpack.c.l.b16 %v112
    %v413 = vunpack.c.l.b16 %v113
    %v414 = vunpack.c.l.b16 %v114
    %v415 = vunpack.c.l.b16 %v115
    %v416 = vunpack.c.l.b16 %v116
    %v417 = vunpack.c.l.b16 %v117
    %v418 = vunpack.c.l.b16 %v118
    %v419 = vunpack.c.l.b16 %v119
    %v420 = vunpack.c.l.b16 %v120
    %v421 = vunpack.c.l.b16 %v121
    %v422 = vunpack.c.l.b16 %v122
    %v423 = vunpack.c.l.b16 %v123
    %v424 = vunpack.c.l.b16 %v124
    %v425 = vunpack.c.l.b16 %v125
    %v426 = vunpack.c.l.b16 %v126
    %v427 = vunpack.c.l.b16 %v127
    %v428 = vunpack.c.l.b16 %v128
    %v429 = vunpack.c.l.b16 %v129
    %v430 = vunpack.c.l.b16 %v130
    %v431 = vunpack.c.l.b16 %v131
    %v432 = vunpack.c.l.b16 %v132
    %v433 = vunpack.c.l.b16 %v133
    %v434 = vunpack.c.l.b16 %v134
    %v435 = vunpack.c.l.b16 %v135
    %v436 = vunpack.c.l.b16 %v136
    %v437 = vunpack.c.l.b16 %v137
    %v438 = vunpack.c.l.b16 %v138
    %v439 = vunpack.c.l.b16 %v139
    %v440 = vunpack.c.l.b16 %v140
    %v441 = vunpack.c.l.b16 %v141
    %v442 = vunpack.c.l.b16 %v142
    %v443 = vunpack.c.l.b16 %v143
    %v444 = vunpack.c.l.b16 %v144
    %v445 = vunpack.c.l.b16 %v145
    %v446 = vunpack.c.l.b16 %v146
    %v447 = vunpack.c.l.b16 %v147
    %v448 = vunpack.c.l.b16 %v148
    %v449 = vunpack.c.l.b16 %v149
    %v450 = vunpack.c.l.b16 %v150
    %v451 = vunpack.c.l.b16 %v151
    %v452 = vunpack.c.l.b16 %v152
    %v453 = vunpack.c.l.b16 %v153
    %v454 = vunpack.c.l.b16 %v154
    %v455 = vunpack.c.l.b16 %v155
    %v456 = vunpack.c.l.b16 %v156
    %v457 = vunpack.c.l.b16 %v157
    %v458 = vunpack.c.l.b16 %v158
    %v459 = vunpack.c.l.b16 %v159
    %v460 = vunpack.c.l.b16 %v160
    %v461 = vunpack.c.l.b16 %v161
    %v462 = vunpack.c.l.b16 %v162
    %v463 = vunpack.c.l.b16 %v163
    %v464 = vunpack.c.l.b16 %v164
    %v465 = vunpack.c.l.b16 %v165
    %v466 = vunpack.c.l.b16 %v166
    %v467 = vunpack.c.l.b16 %v167
    %v468 = vunpack.c.l.b16 %v168
    %v469 = vunpack.c.l.b16 %v169
    %v470 = vunpack.c.l.b16 %v170
    %v471 = vunpack.c.l.b16 %v171
    %v472 = vunpack.c.l.b16 %v172
    %v473 = vunpack.c.l.b16 %v173
    %v474 = vunpack.c.l.b16 %v174
    %v475 = vunpack.c.l.b16 %v175
    %v476 = vunpack.c.l.b16 %v176
    %v477 = vunpack.c.l.b16 %v177
    %v478 = vunpack.c.l.b16 %v178
    %v479 = vunpack.c.l.b16 %v179
    %v480 = vunpack.c.l.b16 %v180
    %v481 = vunpack.c.l.b16 %v181
    %v482 = vunpack.c.l.b16 %v182
    %v483 = vunpack.c.l.b16 %v183
    %v484 = vunpack.c.l.b16 %v184
    %v485 = vunpack.c.l.b16 %v185
    %v486 = vunpack.c.l.b16 %v186
    %v487 = vunpack.c.l.b16 %v187
    %v488 = vunpack.c.l.b16 %v188
    %v489 = vunpack.c.l.b16 %v189
    %v490 = vunpack.c.l.b16 %v190
    %v491 = vunpack.c.l.b16 %v191
    %v492 = vunpack.c.l.b16 %v192
    %v493 = vunpack.c.l.b16 %v193
    %v494 = vunpack.c.l.b16 %v194
    %v495 = vunpack.c.l.b16 %v195
    %v496 = vunpack.c.l.b16 %v196
    %v497 = vunpack.c.l.b16 %v197
    %v498 = vunpack.c.l.b16 %v198
    %v499 = vunpack.c.l.b16 %v199
    %v500 = vunpack.c.l.b16 %v200
    %v501 = vunpack.c.l.b16 %v201
    %v502 = vunpack.c.l.b16 %v202
    %v503 = vunpack.c.l.b16 %v203
    %v504 = vunpack.c.l.b16 %v204
    %v505 = vunpack.c.l.b16 %v205
    %v506 = vunpack.c.l.b16 %v206
    %v507 = vunpack.c.l.b16 %v207
    %v508 = vunpack.c.l.b16 %v208
    %v509 = vunpack.c.l.b16 %v209
    %v510 = vunpack.c.l.b16 %v210
    %v511 = vunpack.c.l.b16 %v211
    %v512 = vunpack.c.l.b16 %v212
    %v513 = vunpack.c.l.b16 %v213
    %v514 = vunpack.c.l.b16 %v214
    %v515 = vunpack.c.l.b16 %v215
    %v516 = vunpack.c.l.b16 %v216
    %v517 = vunpack.c.l.b16 %v217
    %v518 = vunpack.c.l.b16 %v218
    %v519 = vunpack.c.l.b16 %v219
    %v520 = vunpack.c.l.b16 %v220
    %v521 = vunpack.c.l.b16 %v221
    %v522 = vunpack.c.l.b16 %v222
    %v523 = vunpack.c.l.b16 %v223
    %v524 = vunpack.c.l.b16 %v224
    %v525 = vpack.c.b16 %v398, %v397
    %v526 = vpack.c.b16 %v400, %v399
    %v527 = vpack.c.b16 %v402, %v401
    %v528 = vpack.c.b16 %v404, %v403
    %v529 = vpack.c.b16 %v406, %v405
    %v530 = vpack.c.b16 %v408, %v407
    %v531 = vpack.c.b16 %v410, %v409
    %v532 = vpack.c.b16 %v412, %v411
    %v533 = vpack.c.b16 %v414, %v413
    %v534 = vpack.c.b16 %v416, %v415
    %v535 = vpack.c.b16 %v418, %v417
    %v536 = vpack.c.b16 %v420, %v419
    %v537 = vpack.c.b16 %v422, %v421
    %v538 = vpack.c.b16 %v424, %v423
    %v539 = vpack.c.b16 %v426, %v425
    %v540 = vpack.c.b16 %v428, %v427
    %v541 = vpack.c.b16 %v430, %v429
    %v542 = vpack.c.b16 %v432, %v431
    %v543 = vpack.c.b16 %v434, %v433
    %v544 = vpack.c.b16 %v436, %v435
    %v545 = vpack.c.b16 %v438, %v437
    %v546 = vpack.c.b16 %v440, %v439
    %v547 = vpack.c.b16 %v442, %v441
    %v548 = vpack.c.b16 %v444, %v443
    %v549 = vpack.c.b16 %v446, %v445
    %v550 = vpack.c.b16 %v448, %v447
    %v551 = vpack.c.b16 %v450, %v449
    %v552 = vpack.c.b16 %v452, %v451
    %v553 = vpack.c.b16 %v454, %v453
    %v554 = vpack.c.b16 %v456, %v455
    %v555 = vpack.c.b16 %v458, %v457
    %v556 = vpack.c.b16 %v460, %v459
    %v557 = vpack.c.b16 %v462, %v461
    %v558 = vpack.c.b16 %v464, %v463
    %v559 = vpack.c.b16 %v466, %v465
    %v560 = vpack.c.b16 %v468, %v467
    %v561 = vpack.c.b16 %v470, %v469
    %v562 = vpack.c.b16 %v472, %v471
    %v563 = vpack.c.b16 %v474, %v473
    %v564 = vpack.c.b16 %v476, %v475
    %v565 = vpack.c.b16 %v478, %v477
    %v566 = vpack.c.b16 %v480, %v479
    %v567 = vpack.c.b16 %v482, %v481
    %v568 = vpack.c.b16 %v484, %v483
    %v569 = vpack.c.b16 %v486, %v485
    %v570 = vpack.c.b16 %v488, %v487
    %v571 = vpack.c.b16 %v490, %v489
    %v572 = vpack.c.b16 %v492, %v491
    %v573 = vpack.c.b16 %v494, %v493
    %v574 = vpack.c.b16 %v496, %v495
    %v575 = vpack.c.b16 %v498, %v497
    %v576 = vpack.c.b16 %v500, %v499
    %v577 = vpack.c.b16 %v502, %v501
    %v578 = vpack.c.b16 %v504, %v503
    %v579 = vpack.c.b16 %v506, %v505
    %v580 = vpack.c.b16 %v508, %v507
    %v581 = vpack.c.b16 %v510, %v509
    %v582 = vpack.c.b16 %v512, %v511
    %v583 = vpack.c.b16 %v514, %v513
    %v584 = vpack.c.b16 %v516, %v515
    %v585 = vpack.c.b16 %v518, %v517
    %v586 = vpack.c.b16 %v520, %v519
    %v587 = vpack.c.b16 %v522, %v521
    %v588 = vpack.c.b16 %v524, %v523
    %653 = vmatpush.bf16.msra.mxu0 %v532
    %654 = vmatpush.bf16.msra.mxu0 %v531
    %655 = vmatpush.bf16.msra.mxu0 %v530
    %656 = vmatpush.bf16.msra.mxu0 %v529
    %657 = vmatpush.bf16.msra.mxu0 %v528
    %658 = vmatpush.bf16.msra.mxu0 %v527
    %659 = vmatpush.bf16.msra.mxu0 %v526
    %660 = vmatpush.bf16.msra.mxu0 %v525
    %661 = vmatmul.bf16.gmra.mxu0 %v253
    %v662 = vpop.f32.mrf.mxu0
    %v663 = vadd.f32 %v227, %v662
    %v664 = vpop.f32.mrf.mxu0
    %v665 = vadd.f32 %v227, %v664
    %666 = vdwg.mxu0
    %667 = vmatpush.bf16.msra.mxu0 %v540
    %668 = vmatpush.bf16.msra.mxu0 %v539
    %669 = vmatpush.bf16.msra.mxu0 %v538
    %670 = vmatpush.bf16.msra.mxu0 %v537
    %671 = vmatpush.bf16.msra.mxu0 %v536
    %672 = vmatpush.bf16.msra.mxu0 %v535
    %673 = vmatpush.bf16.msra.mxu0 %v534
    %674 = vmatpush.bf16.msra.mxu0 %v533
    %675 = vmatmul.bf16.gmra.mxu0 %v254
    %v676 = vpop.f32.mrf.mxu0
    %v677 = vadd.f32 %v663, %v676
    %v678 = vpop.f32.mrf.mxu0
    %v679 = vadd.f32 %v665, %v678
    %680 = vdwg.mxu0
    %681 = vmatpush.bf16.msra.mxu0 %v548
    %682 = vmatpush.bf16.msra.mxu0 %v547
    %683 = vmatpush.bf16.msra.mxu0 %v546
    %684 = vmatpush.bf16.msra.mxu0 %v545
    %685 = vmatpush.bf16.msra.mxu0 %v544
    %686 = vmatpush.bf16.msra.mxu0 %v543
    %687 = vmatpush.bf16.msra.mxu0 %v542
    %688 = vmatpush.bf16.msra.mxu0 %v541
    %689 = vmatmul.bf16.gmra.mxu0 %v255
    %v690 = vpop.f32.mrf.mxu0
    %v691 = vadd.f32 %v677, %v690
    %v692 = vpop.f32.mrf.mxu0
    %v693 = vadd.f32 %v679, %v692
    %694 = vdwg.mxu0
    %695 = vmatpush.bf16.msra.mxu0 %v556
    %696 = vmatpush.bf16.msra.mxu0 %v555
    %697 = vmatpush.bf16.msra.mxu0 %v554
    %698 = vmatpush.bf16.msra.mxu0 %v553
    %699 = vmatpush.bf16.msra.mxu0 %v552
    %700 = vmatpush.bf16.msra.mxu0 %v551
    %701 = vmatpush.bf16.msra.mxu0 %v550
    %702 = vmatpush.bf16.msra.mxu0 %v549
    %703 = vmatmul.bf16.gmra.mxu0 %v256
    %v704 = vpop.f32.mrf.mxu0
    %v705 = vadd.f32 %v691, %v704
    %v706 = vpop.f32.mrf.mxu0
    %v707 = vadd.f32 %v693, %v706
    %708 = vdwg.mxu0
    %709 = vmatpush.bf16.msra.mxu0 %v564
    %710 = vmatpush.bf16.msra.mxu0 %v563
    %711 = vmatpush.bf16.msra.mxu0 %v562
    %712 = vmatpush.bf16.msra.mxu0 %v561
    %713 = vmatpush.bf16.msra.mxu0 %v560
    %714 = vmatpush.bf16.msra.mxu0 %v559
    %715 = vmatpush.bf16.msra.mxu0 %v558
    %716 = vmatpush.bf16.msra.mxu0 %v557
    %717 = vmatmul.bf16.gmra.mxu0 %v257
    %v718 = vpop.f32.mrf.mxu0
    %v719 = vadd.f32 %v705, %v718
    %v720 = vpop.f32.mrf.mxu0
    %v721 = vadd.f32 %v707, %v720
    %722 = vdwg.mxu0
    %723 = vmatpush.bf16.msra.mxu0 %v572
    %724 = vmatpush.bf16.msra.mxu0 %v571
    %725 = vmatpush.bf16.msra.mxu0 %v570
    %726 = vmatpush.bf16.msra.mxu0 %v569
    %727 = vmatpush.bf16.msra.mxu0 %v568
    %728 = vmatpush.bf16.msra.mxu0 %v567
    %729 = vmatpush.bf16.msra.mxu0 %v566
    %730 = vmatpush.bf16.msra.mxu0 %v565
    %731 = vmatmul.bf16.gmra.mxu0 %v258
    %v732 = vpop.f32.mrf.mxu0
    %v733 = vadd.f32 %v719, %v732
    %v734 = vpop.f32.mrf.mxu0
    %v735 = vadd.f32 %v721, %v734
    %736 = vdwg.mxu0
    %737 = vmatpush.bf16.msra.mxu0 %v580
    %738 = vmatpush.bf16.msra.mxu0 %v579
    %739 = vmatpush.bf16.msra.mxu0 %v578
    %740 = vmatpush.bf16.msra.mxu0 %v577
    %741 = vmatpush.bf16.msra.mxu0 %v576
    %742 = vmatpush.bf16.msra.mxu0 %v575
    %743 = vmatpush.bf16.msra.mxu0 %v574
    %744 = vmatpush.bf16.msra.mxu0 %v573
    %745 = vmatmul.bf16.gmra.mxu0 %v259
    %v746 = vpop.f32.mrf.mxu0
    %v747 = vadd.f32 %v733, %v746
    %v748 = vpop.f32.mrf.mxu0
    %v749 = vadd.f32 %v735, %v748
    %750 = vdwg.mxu0
    %751 = vmatpush.bf16.msra.mxu0 %v588
    %752 = vmatpush.bf16.msra.mxu0 %v587
    %753 = vmatpush.bf16.msra.mxu0 %v586
    %754 = vmatpush.bf16.msra.mxu0 %v585
    %755 = vmatpush.bf16.msra.mxu0 %v584
    %756 = vmatpush.bf16.msra.mxu0 %v583
    %757 = vmatpush.bf16.msra.mxu0 %v582
    %758 = vmatpush.bf16.msra.mxu0 %v581
    %759 = vmatmul.bf16.gmra.mxu0 %v260
    %v760 = vpop.f32.mrf.mxu0
    %v761 = vadd.f32 %v747, %v760
    %v762 = vpop.f32.mrf.mxu0
    %v763 = vadd.f32 %v749, %v762
    %764 = vdwg.mxu0
    %v765 = vmax.f32 %v761, 0.0
    %v766 = vmax.f32 %v763, 0.0
    %v767 = vpack.c.bf16 %v766, %v765
    %v768 = vld [vmem:[#allocation9] sm:$0xf]
    %v769 = vld [vmem:[#allocation9 + $0x4] sm:$0xf]
    %v770 = vld [vmem:[#allocation9 + $0x8] sm:$0xf]
    %v771 = vld [vmem:[#allocation9 + $0xc] sm:$0xf]
    %v772 = vld [vmem:[#allocation9 + $0x10] sm:$0xf]
    %v773 = vld [vmem:[#allocation9 + $0x14] sm:$0xf]
    %v774 = vld [vmem:[#allocation9 + $0x18] sm:$0xf]
    %v775 = vld [vmem:[#allocation9 + $0x1c] sm:$0xf]
    %v776 = vld [vmem:[#allocation9 + $0x20] sm:$0xf]
    %v777 = vld [vmem:[#allocation9 + $0x24] sm:$0xf]
    %v778 = vld [vmem:[#allocation9 + $0x28] sm:$0xf]
    %v779 = vld [vmem:[#allocation9 + $0x2c] sm:$0xf]
    %v780 = vld [vmem:[#allocation9 + $0x30] sm:$0xf]
    %v781 = vld [vmem:[#allocation9 + $0x34] sm:$0xf]
    %v782 = vld [vmem:[#allocation9 + $0x38] sm:$0xf]
    %v783 = vld [vmem:[#allocation9 + $0x3c] sm:$0xf]
    %v784 = vld [vmem:[%s87] sm:$0x1]
    %v786 = vperm.slane %v784, 0
    %v804 = vunpack.c.l.b16 %v768
    %v805 = vunpack.c.l.b16 %v769
    %v806 = vunpack.c.l.b16 %v770
    %v807 = vunpack.c.l.b16 %v771
    %v808 = vunpack.c.l.b16 %v772
    %v809 = vunpack.c.l.b16 %v773
    %v810 = vunpack.c.l.b16 %v774
    %v811 = vunpack.c.l.b16 %v775
    %v812 = vunpack.c.l.b16 %v776
    %v813 = vunpack.c.l.b16 %v777
    %v814 = vunpack.c.l.b16 %v778
    %v815 = vunpack.c.l.b16 %v779
    %v816 = vunpack.c.l.b16 %v780
    %v817 = vunpack.c.l.b16 %v781
    %v818 = vunpack.c.l.b16 %v782
    %v819 = vunpack.c.l.b16 %v783
    %v820 = vpack.c.b16 %v805, %v804
    %v821 = vpack.c.b16 %v807, %v806
    %v822 = vpack.c.b16 %v809, %v808
    %v823 = vpack.c.b16 %v811, %v810
    %v824 = vpack.c.b16 %v813, %v812
    %v825 = vpack.c.b16 %v815, %v814
    %v826 = vpack.c.b16 %v817, %v816
    %v827 = vpack.c.b16 %v819, %v818
    %836 = vmatpush.bf16.msra.mxu0 %v827
    %837 = vmatpush.bf16.msra.mxu0 %v826
    %838 = vmatpush.bf16.msra.mxu0 %v825
    %839 = vmatpush.bf16.msra.mxu0 %v824
    %840 = vmatpush.bf16.msra.mxu0 %v823
    %841 = vmatpush.bf16.msra.mxu0 %v822
    %842 = vmatpush.bf16.msra.mxu0 %v821
    %843 = vmatpush.bf16.msra.mxu0 %v820
    %844 = vmatmul.bf16.gmra.mxu0 %v767
    %v845 = vpop.f32.mrf.mxu0
    %v846 = vadd.f32 %v786, %v845
    %v847 = vpop.f32.mrf.mxu0
    %v848 = vadd.f32 %v786, %v847
    %849 = vdwg.mxu0
    %850 = vst [vmem:[#allocation10] sm:$0xff] %v846
    %851 = vst [vmem:[#allocation10 + $0x8] sm:$0xff] %v848
    // Predicated region
    $region34: #{tpu_custom_call.1} parent=1 // pred_check
      _
    $region35: #{tpu_custom_call.1} parent=1 // pred_check_branch
      %853 = sbr.rel (0) target = $region37
    $region36: #{tpu_custom_call.1} parent=1 // pred_region
      %855 = vsyncadd [#allocation6], 0
      %s856 = sshll.u32 [#allocation10], 4
      %s857 = int_to_ptr.vmem [resolvable:$true] %s856
      %s858 = sshll.u32 %s6, 4
      %s859 = int_to_ptr.hbm [resolvable:$true] %s858
      %864 = dma.vmem_to_hbm [thread:$0]  %s857, 256, %s859, [#allocation6], 128, 128, 8
    $region37: #{tpu_custom_call.1} parent=1 // pred_fallthru
      _
    // Predicated region
    $region38: #{tpu_custom_call.1} parent=1 // pred_check
      _
    $region39: #{tpu_custom_call.1} parent=1 // pred_check_branch
      %866 = sbr.rel (0) target = $region41
    $region40: #{tpu_custom_call.1} parent=1 // pred_region
      %868 = dma.done [#allocation6], 256
    $region41: #{tpu_custom_call.1} parent=1 // pred_fallthru
      _
    %869 = vsyncpa [#allocation5], 1
    %870 = vsyncpa [#allocation8], 1
    %871 = vsyncpa [#allocation6], 1

</llo_original>
